<compile_context>
chip_gen: v5e
topology: v5e:2x2
jax: 0.10.0
libtpu: 0.0.40
codegen_flags: <defaults>
</compile_context>

<pallas_src>
import math
from functools import partial

import jax
import jax.numpy as jnp
from jax import lax
from jax.experimental import pallas as pl
from jax.experimental.pallas import tpu as pltpu

_LANE = 128
_LOG_TWO_PI = math.log(2.0 * math.pi)


def _cdiv(a, b):
    return -(-a // b)


def _device_kind():
    try:
        return jax.devices()[0].device_kind.lower()
    except Exception:
        return ""


def _default_num_partials():
    kind = _device_kind()
    # 2 TensorCores per device on megacore parts; v5e / v6e are single-TC.
    if any(tag in kind for tag in ("v7", "7x", "v4", "v5p")):
        return 2
    return 1


def _vmem_capacity_bytes():
    try:
        cap = int(pltpu.get_tpu_info().vmem_capacity_bytes)
        if cap > 0:
            return cap
    except Exception:
        pass
    kind = _device_kind()
    if "v7" in kind or "7x" in kind:
        return 64 << 20
    return 128 << 20


def _sublane_pack(dsize):
    # second-minor-dim padding granularity per dtype (for VMEM/HBM sizing)
    return {1: 32, 2: 16, 4: 8}.get(dsize, 8)


def _make_sumsq_kernel(tn, steps, n_rows, ragged):
    """Streaming per-(h, w) sum of squares over (tn, H, W) blocks.

    z_ref:   (tn, H, W) VMEM tile of z viewed as (B*C, H, W)
    out_ref: (1,  H, W) f32 partial sums, resident across the j (reduction) axis
    """

    def kernel(z_ref, out_ref):
        p = pl.program_id(0)
        j = pl.program_id(1)

        @pl.when(j == 0)
        def _():
            out_ref[...] = jnp.zeros_like(out_ref)

        z = z_ref[...].astype(jnp.float32)
        zz = z * z  # constants folded out; pure VPU work per step

        if ragged:
            start = (p * steps + j) * tn

            @pl.when(start + tn <= n_rows)
            def _():
                out_ref[...] += jnp.sum(zz, axis=0, keepdims=True)

            @pl.when(start + tn > n_rows)
            def _():
                row = start + lax.broadcasted_iota(jnp.int32, zz.shape, 0)
                zz_m = jnp.where(row < n_rows, zz, 0.0)
                out_ref[...] += jnp.sum(zz_m, axis=0, keepdims=True)
        else:
            out_ref[...] += jnp.sum(zz, axis=0, keepdims=True)

    return kernel


@partial(jax.jit, static_argnames=("num_partials", "target_tile_bytes"))
def likelihood_loss(z, logdet, *, num_partials=None, target_tile_bytes=16 << 20):
    """z: (B, C, H, W) float, logdet: (B,) -> scalar f32 NLL (batch mean)."""
    B, C, H, W = z.shape
    T = int(z.size)  # B*C*H*W
    dsize = jnp.dtype(z.dtype).itemsize

    # Collapse only the two major dims: (B, C, H, W) -> (B*C, H, W).
    # The (8,128)-tiled layout of the minor dims is untouched, so under jit
    # this is metadata-only (no relayout copy feeding the pallas_call).
    N = B * C
    z3 = z.reshape(N, H, W)

    P = _default_num_partials() if num_partials is None else max(1, int(num_partials))
    P = min(P, N)

    # Padded footprint of one (1, H, W) slab (what it costs in VMEM / HBM).
    pack = _sublane_pack(dsize)
    hp = _cdiv(H, pack) * pack
    wp = _cdiv(W, _LANE) * _LANE
    slab_bytes = hp * wp * dsize
    out_block_bytes = hp * wp * 4

    # VMEM budget: 2x double-buffered input tile + resident output + headroom,
    # capped well below physical capacity (important on v7x's 64 MiB VMEM).
    cap = _vmem_capacity_bytes()
    budget = min(int(cap * 3 / 4), cap - (8 << 20))
    tile_budget = max(
        slab_bytes,
        min(int(target_tile_bytes),
            (budget - 2 * out_block_bytes - (4 << 20)) // 2),
    )
    # TODO(synk): if a single (1, H, W) slab ever exceeds the VMEM budget
    # (enormous spatial dims), add a second-level tiling over H.

    rows_per_p = _cdiv(N, P)
    tn = max(1, min(rows_per_p, tile_budget // slab_bytes))
    steps = _cdiv(rows_per_p, tn)
    ragged = (P * steps * tn) != N

    tile_bytes = tn * slab_bytes
    vmem_limit = min(
        cap - (4 << 20),
        max(2 * tile_bytes + 2 * out_block_bytes + (4 << 20), 16 << 20),
    )

    last_block = _cdiv(N, tn) - 1  # clamp: no block ever starts out of bounds

    partials = pl.pallas_call(
        _make_sumsq_kernel(tn, steps, N, ragged),
        out_shape=jax.ShapeDtypeStruct((P, H, W), jnp.float32),
        grid_spec=pltpu.PrefetchScalarGridSpec(
            num_scalar_prefetch=0,
            grid=(P, steps),
            in_specs=[
                pl.BlockSpec(
                    (tn, H, W),
                    lambda p, j: (jnp.minimum(p * steps + j, last_block), 0, 0),
                ),
            ],
            out_specs=pl.BlockSpec((1, H, W), lambda p, j: (p, 0, 0)),
        ),
        compiler_params=pltpu.CompilerParams(
            dimension_semantics=("parallel", "arbitrary"),
            vmem_limit_bytes=int(vmem_limit),
        ),
        cost_estimate=pl.CostEstimate(
            flops=2 * T,
            transcendentals=0,
            bytes_accessed=N * slab_bytes + P * out_block_bytes,
        ),
    )(z3)

    # Tiny scalar epilogue: combine per-(h, w) partial sums + analytic
    # Gaussian constant + logdet.
    total_sq = jnp.sum(partials)
    log_p_total = -0.5 * total_sq - jnp.float32(0.5 * T * _LOG_TWO_PI)
    loss = -(log_p_total + jnp.sum(logdet.astype(jnp.float32))) / jnp.float32(B)
    return loss


def likelihood_loss_ref(z, logdet):
    """Pure-JAX reference mirroring the PyTorch module."""
    log_two_pi = jnp.log(jnp.asarray(2.0 * math.pi, dtype=z.dtype))
    logp = -0.5 * (jnp.zeros_like(z)
                   + (z - 0.0) ** 2 / jnp.exp(jnp.zeros_like(z))
                   + log_two_pi)
    log_p = jnp.sum(logp, axis=(1, 2, 3))
    return -jnp.mean(log_p + logdet)


if __name__ == "__main__":
    key = jax.random.PRNGKey(0)
    kz, kd = jax.random.split(key)

    B, C, H, W = 2, 4, 16, 16
    z = jax.random.normal(kz, (B, C, H, W), dtype=jnp.float32)
    logdet = jax.random.normal(kd, (B,), dtype=jnp.float32)

    loss = likelihood_loss(z, logdet)
    loss = jax.block_until_ready(loss)

    ref = likelihood_loss_ref(z, logdet)
    assert jnp.allclose(loss, ref, rtol=1e-5, atol=1e-5), (loss, ref)

    print("KERNEL_OK")
</pallas_src>

<mosaic_0001>
module attributes {stable_mosaic.version = 11 : i64} {
  func.func @kernel(%arg0: i32, %arg1: i32, %arg2: memref<8x16x16xf32, #tpu.memory_space<vmem>>, %arg3: memref<1x16x16xf32, #tpu.memory_space<vmem>>) attributes {dimension_semantics = [#tpu.dimension_semantics<parallel>, #tpu.dimension_semantics<arbitrary>], iteration_bounds = array<i64: 1, 1>, scalar_prefetch = 0 : i64, scratch_operands = 0 : i64, tpu.core_type = #tpu.core_type<tc>, window_params = [{transform_indices = @transform_0, window_bounds = array<i64: 8, 16, 16>}, {transform_indices = @transform_1, window_bounds = array<i64: 1, 16, 16>}]} {
    %c0_i32 = arith.constant 0 : i32
    %0 = arith.cmpi eq, %arg1, %c0_i32 : i32
    %1 = arith.extui %0 : i1 to i32
    %c0_i32_0 = arith.constant 0 : i32
    %2 = arith.cmpi ne, %1, %c0_i32_0 : i32
    scf.if %2 {
      %cst_9 = arith.constant 0.000000e+00 : f32
      %10 = vector.broadcast %cst_9 : f32 to vector<1x16x16xf32>
      %c0_10 = arith.constant 0 : index
      %c0_11 = arith.constant 0 : index
      %c0_12 = arith.constant 0 : index
      %11 = vector.load %arg3[%c0_10, %c0_11, %c0_12] : memref<1x16x16xf32, #tpu.memory_space<vmem>>, vector<1x16x16xf32>
      tpu.vector_store %arg3[%c0_10, %c0_11, %c0_12], %10 {strides = array<i32>} : memref<1x16x16xf32, #tpu.memory_space<vmem>>, vector<1x16x16xf32>,
    } else {
    }
    %c0 = arith.constant 0 : index
    %c0_1 = arith.constant 0 : index
    %c0_2 = arith.constant 0 : index
    %3 = vector.load %arg2[%c0, %c0_1, %c0_2] : memref<8x16x16xf32, #tpu.memory_space<vmem>>, vector<8x16x16xf32>
    %4 = arith.mulf %3, %3 : vector<8x16x16xf32>
    %c0_3 = arith.constant 0 : index
    %c0_4 = arith.constant 0 : index
    %c0_5 = arith.constant 0 : index
    %5 = vector.load %arg3[%c0_3, %c0_4, %c0_5] : memref<1x16x16xf32, #tpu.memory_space<vmem>>, vector<1x16x16xf32>
    %cst = arith.constant dense<0.000000e+00> : vector<16x16xf32>
    %6 = vector.multi_reduction <add>, %4, %cst [0] : vector<8x16x16xf32> to vector<16x16xf32>
    %7 = vector.shape_cast %6 : vector<16x16xf32> to vector<1x16x16xf32>
    %8 = arith.addf %5, %7 : vector<1x16x16xf32>
    %c0_6 = arith.constant 0 : index
    %c0_7 = arith.constant 0 : index
    %c0_8 = arith.constant 0 : index
    %9 = vector.load %arg3[%c0_6, %c0_7, %c0_8] : memref<1x16x16xf32, #tpu.memory_space<vmem>>, vector<1x16x16xf32>
    tpu.vector_store %arg3[%c0_6, %c0_7, %c0_8], %8 {strides = array<i32>} : memref<1x16x16xf32, #tpu.memory_space<vmem>>, vector<1x16x16xf32>,
    return
  }
  func.func @transform_0(%arg0: i32, %arg1: i32) -> (i32, i32, i32) {
    %c1_i32 = arith.constant 1 : i32
    %0 = arith.muli %arg0, %c1_i32 : i32
    %1 = arith.addi %0, %arg1 : i32
    %c0_i32 = arith.constant 0 : i32
    %2 = arith.minsi %1, %c0_i32 : i32
    %c0_i32_0 = arith.constant 0 : i32
    %c0_i32_1 = arith.constant 0 : i32
    %c0_i32_2 = arith.constant 0 : i32
    return %2, %c0_i32_0, %c0_i32_1 : i32, i32, i32
  }
  func.func @transform_1(%arg0: i32, %arg1: i32) -> (i32, i32, i32) {
    %c0_i32 = arith.constant 0 : i32
    %c0_i32_0 = arith.constant 0 : i32
    %c0_i32_1 = arith.constant 0 : i32
    return %arg0, %c0_i32, %c0_i32_0 : i32, i32, i32
  }
}

</mosaic_0001>

<llo_original>
// kernel: likelihood_loss.1
$region0: #{likelihood_loss.1}
  #allocation0 [shape = 'u32[]', space=smem, size = 0x4, offset = 0x4, fixed_abs, tag = 'smem constant byte address 0x4 - core index']
  #allocation1 [shape = 'u32[72,128]{1,0:T(1,128)}', space=vmem, size = 0x9000, scoped, tag = 'internal scratch']
  %s0 = inlined_call_operand.hbm [shape: f32[8,16,16], index: 0, kind: input, shape index: {}]
  %s1 = inlined_call_operand.vmem [shape: f32[1,16,16], index: 1, kind: output, shape index: {}]
  %s2 = sld [smem:[#allocation0]]
  $region22: #{likelihood_loss.1} parent=0
    _
  %s4 = ssub.s32 1, %s2
  %s5 = scalar_select 0, %s4, %s2
  $region1: #{likelihood_loss.1} parent=0
    #allocation2 [shape = 'u8[65536]{0}', space=vmem, size = 0x10000, scoped, tag = 'input window, operand 0, single buffered']
    #allocation3 [shape = 's32[1]{0}', space=sflag, size = 0x4, scoped, tag = 'scoped memory for likelihood_loss.1']
    %6 = vsyncpa [#allocation3], 0
    // Predicated region
    $region2: #{likelihood_loss.1} parent=1 // pred_check
      _
    $region3: #{likelihood_loss.1} parent=1 // pred_check_branch
      %8 = sbr.rel (0) target = $region5
    $region4: #{likelihood_loss.1} parent=1 // pred_region
      %s9 = sadd.s32 0, 0
      %p10 = scmp.lt.s32.totalorder %s9, 0
      %s11 = scalar_select %p10, %s9, 0
      %s12 = smul.u32 8, %s11
      %14 = vsyncadd [#allocation3], 0
      %s15 = smul.addr %s12, 2
      %s16 = smul.addr %s15, 8
      %s17 = scalar_lea.hbm %s0, %s16
      %s18 = sshll.u32 %s17, 4
      %s19 = int_to_ptr.hbm [resolvable:$true] %s18
      %s20 = sshll.u32 [#allocation2], 4
      %s21 = int_to_ptr.vmem [resolvable:$true] %s20
      %26 = dma.hbm_to_vmem [thread:$0]  %s19, 2048, %s21, [#allocation3], 128, 128, 8
    $region5: #{likelihood_loss.1} parent=1 // pred_fallthru
      _
    // Predicated region
    $region6: #{likelihood_loss.1} parent=1 // pred_check
      _
    $region7: #{likelihood_loss.1} parent=1 // pred_check_branch
      %28 = sbr.rel (0) target = $region9
    $region8: #{likelihood_loss.1} parent=1 // pred_region
      %30 = dma.done [#allocation3], 2048
    $region9: #{likelihood_loss.1} parent=1 // pred_fallthru
      _
    %s31 = sadd.s32 0, 0
    %p32 = scmp.lt.s32.totalorder %s31, 0
    %s33 = scalar_select %p32, %s31, 0
    %s34 = smul.u32 8, %s33
    %p35 = scmp.eq.s32.totalorder 0, 0
    // Predicated region
    $region10: #{likelihood_loss.1} parent=1 // pred_check
      %p36 = pneg %p35
    $region11: #{likelihood_loss.1} parent=1 // pred_check_branch
      %38 = sbr.rel (%p36) target = $region13
    $region12: #{likelihood_loss.1} parent=1 // pred_region
      %vm39 = vcmask 130048
      %40 = vst.msk [vmem:[%s1] sm:$0xff] %vm39, 0.0
      %41 = vst.msk [vmem:[%s1 + $0x8] sm:$0xff] %vm39, 0.0
    $region13: #{likelihood_loss.1} parent=1 // pred_fallthru
      _
    %v42 = vld [vmem:[#allocation2] sm:$0xff]
    %v43 = vld [vmem:[#allocation2 + $0x8] sm:$0xff]
    %v44 = vld [vmem:[#allocation2 + $0x10] sm:$0xff]
    %v45 = vld [vmem:[#allocation2 + $0x18] sm:$0xff]
    %v46 = vld [vmem:[#allocation2 + $0x20] sm:$0xff]
    %v47 = vld [vmem:[#allocation2 + $0x28] sm:$0xff]
    %v48 = vld [vmem:[#allocation2 + $0x30] sm:$0xff]
    %v49 = vld [vmem:[#allocation2 + $0x38] sm:$0xff]
    %v50 = vld [vmem:[#allocation2 + $0x40] sm:$0xff]
    %v51 = vld [vmem:[#allocation2 + $0x48] sm:$0xff]
    %v52 = vld [vmem:[#allocation2 + $0x50] sm:$0xff]
    %v53 = vld [vmem:[#allocation2 + $0x58] sm:$0xff]
    %v54 = vld [vmem:[#allocation2 + $0x60] sm:$0xff]
    %v55 = vld [vmem:[#allocation2 + $0x68] sm:$0xff]
    %v56 = vld [vmem:[#allocation2 + $0x70] sm:$0xff]
    %v57 = vld [vmem:[#allocation2 + $0x78] sm:$0xff]
    %v58 = vmul.f32 %v42, %v42
    %v59 = vmul.f32 %v43, %v43
    %v60 = vmul.f32 %v44, %v44
    %v61 = vmul.f32 %v45, %v45
    %v62 = vmul.f32 %v46, %v46
    %v63 = vmul.f32 %v47, %v47
    %v64 = vmul.f32 %v48, %v48
    %v65 = vmul.f32 %v49, %v49
    %v66 = vmul.f32 %v50, %v50
    %v67 = vmul.f32 %v51, %v51
    %v68 = vmul.f32 %v52, %v52
    %v69 = vmul.f32 %v53, %v53
    %v70 = vmul.f32 %v54, %v54
    %v71 = vmul.f32 %v55, %v55
    %v72 = vmul.f32 %v56, %v56
    %v73 = vmul.f32 %v57, %v57
    %v74 = vld [vmem:[%s1] sm:$0xff]
    %v75 = vld [vmem:[%s1 + $0x8] sm:$0xff]
    %vm76 = vcmask 130048
    %v77 = vsel %vm76, %v58, 0.0
    %v78 = vsel %vm76, %v60, 0.0
    %v79 = vadd.f32 %v77, %v78
    %v80 = vsel %vm76, %v62, 0.0
    %v81 = vadd.f32 %v79, %v80
    %v82 = vsel %vm76, %v64, 0.0
    %v83 = vadd.f32 %v81, %v82
    %v84 = vsel %vm76, %v66, 0.0
    %v85 = vadd.f32 %v83, %v84
    %v86 = vsel %vm76, %v68, 0.0
    %v87 = vadd.f32 %v85, %v86
    %v88 = vsel %vm76, %v70, 0.0
    %v89 = vadd.f32 %v87, %v88
    %v90 = vsel %vm76, %v72, 0.0
    %v91 = vadd.f32 %v89, %v90
    %v92 = vsel %vm76, %v59, 0.0
    %v93 = vsel %vm76, %v61, 0.0
    %v94 = vadd.f32 %v92, %v93
    %v95 = vsel %vm76, %v63, 0.0
    %v96 = vadd.f32 %v94, %v95
    %v97 = vsel %vm76, %v65, 0.0
    %v98 = vadd.f32 %v96, %v97
    %v99 = vsel %vm76, %v67, 0.0
    %v100 = vadd.f32 %v98, %v99
    %v101 = vsel %vm76, %v69, 0.0
    %v102 = vadd.f32 %v100, %v101
    %v103 = vsel %vm76, %v71, 0.0
    %v104 = vadd.f32 %v102, %v103
    %v105 = vsel %vm76, %v73, 0.0
    %v106 = vadd.f32 %v104, %v105
    %v107 = vadd.f32 %v74, %v91
    %v108 = vadd.f32 %v75, %v106
    %109 = vst.msk [vmem:[%s1] sm:$0xff] %vm76, %v107
    %110 = vst.msk [vmem:[%s1 + $0x8] sm:$0xff] %vm76, %v108
    // Predicated region
    $region14: #{likelihood_loss.1} parent=1 // pred_check
      _
    $region15: #{likelihood_loss.1} parent=1 // pred_check_branch
      %112 = sbr.rel (0) target = $region17
    $region16: #{likelihood_loss.1} parent=1 // pred_region
      _
    $region17: #{likelihood_loss.1} parent=1 // pred_fallthru
      _
    // Predicated region
    $region18: #{likelihood_loss.1} parent=1 // pred_check
      _
    $region19: #{likelihood_loss.1} parent=1 // pred_check_branch
      %114 = sbr.rel (0) target = $region21
    $region20: #{likelihood_loss.1} parent=1 // pred_region
      _
    $region21: #{likelihood_loss.1} parent=1 // pred_fallthru
      _
    %115 = vsyncpa [#allocation3], 1

</llo_original>
